<compile_context>
chip_gen: v5e
topology: v5e:2x2
jax: 0.10.0
libtpu: 0.0.40
codegen_flags: <defaults>
</compile_context>

<pallas_src>
import math

import jax
import jax.numpy as jnp
from jax.experimental import pallas as pl
from jax.experimental.pallas import tpu as pltpu


_TILE_BYTES = 8 * 1024 * 1024          # per x block (input); ~4x in flight
_VMEM_LIMIT = 48 * 1024 * 1024         # < v7x's 64 MiB physical VMEM


def _scale_kernel(mask_ref, x_ref, o_ref):
    """mask_ref: f32 scale block, broadcastable against x_ref; x/o: data blocks."""
    o_ref[...] = (x_ref[...] * mask_ref[...]).astype(o_ref.dtype)


def _row_align(itemsize):
    """Sublane pack: 8 rows f32, 16 bf16, 32 int8/fp8."""
    return {4: 8, 2: 16, 1: 32}.get(itemsize, 8)


def _largest_divisor_leq(n, m):
    m = int(max(1, min(n, m)))
    for d in range(m, 0, -1):
        if n % d == 0:
            return d
    return 1


def _min_grid_steps(total_bytes):
    """Enough grid steps to shard across v7x's two TensorCores (and balance)."""
    if total_bytes >= (4 << 20):
        return 8
    if total_bytes >= (256 << 10):
        return 2
    return 1


def _run_3d(x3, mask3, *, min_steps):
    """x3: (B, T, C); mask3: (B, 1, C) f32.  Lane-dense when C % 128 == 0."""
    B, T, C = x3.shape
    itemsize = x3.dtype.itemsize
    align = _row_align(itemsize)

    # Guard very wide channels: tile C (multiples of 128) so one block fits.
    tile_c = C
    if align * C * itemsize > _TILE_BYTES and C > 128:
        tile_c = max(128, (_TILE_BYTES // (align * itemsize)) // 128 * 128)
        tile_c = min(tile_c, C)
    gc = pl.cdiv(C, tile_c)

    rows_budget = max(align, _TILE_BYTES // max(1, tile_c * itemsize))
    if T <= rows_budget:
        tile_t = T
        max_b = rows_budget // max(T, 1)
        mask_cap = max(1, (4 << 20) // max(1, tile_c * 8))   # keep mask bufs small
        block_b = _largest_divisor_leq(B, min(max_b, mask_cap))
    else:
        tile_t = max(align, (rows_budget // align) * align)
        block_b = 1
    gt = pl.cdiv(T, tile_t)
    gb = B // block_b

    # Guarantee >= min_steps grid steps (megacore sharding / load balance).
    while gb * gt * gc < min_steps and block_b > 1:
        block_b = _largest_divisor_leq(B, block_b - 1)
        gb = B // block_b
    while gb * gt * gc < min_steps and tile_t > align:
        tile_t = max(align, ((tile_t // 2) // align) * align)
        gt = pl.cdiv(T, tile_t)

    grid = (gb, gt, gc)
    return pl.pallas_call(
        _scale_kernel,
        out_shape=jax.ShapeDtypeStruct((B, T, C), x3.dtype),
        grid_spec=pltpu.PrefetchScalarGridSpec(
            num_scalar_prefetch=0,
            grid=grid,
            in_specs=[
                pl.BlockSpec((block_b, 1, tile_c), lambda b, t, c: (b, 0, c)),
                pl.BlockSpec((block_b, tile_t, tile_c), lambda b, t, c: (b, t, c)),
            ],
            out_specs=pl.BlockSpec((block_b, tile_t, tile_c), lambda b, t, c: (b, t, c)),
        ),
        input_output_aliases={1: 0},
        compiler_params=pltpu.CompilerParams(
            dimension_semantics=("parallel", "parallel", "parallel"),
            vmem_limit_bytes=_VMEM_LIMIT,
        ),
        cost_estimate=pl.CostEstimate(
            flops=int(B * T * C),
            transcendentals=0,
            bytes_accessed=int(2 * B * T * C * itemsize + mask3.size * 4),
        ),
    )(mask3, x3)


def _run_flat(x3, mask_c, kc, *, min_steps):
    """Awkward-C path.  x3: (B, 1, W) with W = T*C; mask_c: (B, C) f32;
    kc = smallest multiple of C that is also a multiple of 128.  Lane tiles of
    width m*kc keep stores unmasked; the pre-tiled mask row stays aligned with
    channels because every block start is a multiple of C."""
    B, _, W = x3.shape
    C = mask_c.shape[1]
    itemsize = x3.dtype.itemsize
    # x/out double-buffered (4*itemsize B/elem) + f32 mask double-buffered (8 B/elem)
    budget_elems = max(kc, min(_TILE_BYTES // itemsize,
                               (36 << 20) // (4 * itemsize + 8)))
    tile_w = kc * max(1, min(budget_elems // kc, max(1, W // kc)))
    gw = pl.cdiv(W, tile_w)
    block_b = _largest_divisor_leq(B, max(1, budget_elems // tile_w))
    gb = B // block_b

    while gb * gw < min_steps and block_b > 1:
        block_b = _largest_divisor_leq(B, block_b - 1)
        gb = B // block_b
    while gb * gw < min_steps and tile_w > kc:
        tile_w = kc * max(1, (tile_w // kc) // 2)
        gw = pl.cdiv(W, tile_w)

    mask_w = jnp.tile(mask_c, (1, tile_w // C)).reshape(B, 1, tile_w)

    return pl.pallas_call(
        _scale_kernel,
        out_shape=jax.ShapeDtypeStruct(x3.shape, x3.dtype),
        grid_spec=pltpu.PrefetchScalarGridSpec(
            num_scalar_prefetch=0,
            grid=(gb, gw),
            in_specs=[
                pl.BlockSpec((block_b, 1, tile_w), lambda b, w: (b, 0, 0)),
                pl.BlockSpec((block_b, 1, tile_w), lambda b, w: (b, 0, w)),
            ],
            out_specs=pl.BlockSpec((block_b, 1, tile_w), lambda b, w: (b, 0, w)),
        ),
        input_output_aliases={1: 0},
        compiler_params=pltpu.CompilerParams(
            dimension_semantics=("parallel", "parallel"),
            vmem_limit_bytes=_VMEM_LIMIT,
        ),
        cost_estimate=pl.CostEstimate(
            flops=int(B * W),
            transcendentals=0,
            bytes_accessed=int(2 * B * W * itemsize + mask_w.size * 4),
        ),
    )(mask_w, x3)


def spatial_dropout(x, *, drop=0.5, seed=0, training=True, key=None):
    """Pallas SpatialDropout forward.  x: (B, ..., C), any number of middle dims.

    NOTE: pass a fresh `key` (or `seed`) every training step; reusing the same
    seed reproduces the identical dropout mask each step.
    """
    if (not training) or drop == 0.0:
        return x
    if drop >= 1.0:
        return jnp.zeros_like(x)
    if x.ndim < 2:
        raise ValueError("SpatialDropout expects at least (batch, channels) dims")

    orig_shape = x.shape
    B, C = orig_shape[0], orig_shape[-1]
    T = int(math.prod(orig_shape[1:-1]))            # 1 when x is 2-D
    keep_prob = 1.0 - float(drop)

    if key is None:
        key = jax.random.PRNGKey(seed)
    keep = jax.random.bernoulli(key, p=keep_prob, shape=(B, 1, C))
    # Keep the mask in f32 so the 1/keep_prob scale is exact (no bf16 bias).
    mask = keep.astype(jnp.float32) * jnp.float32(1.0 / keep_prob)

    min_steps = _min_grid_steps(x.size * x.dtype.itemsize)

    k = 128 // math.gcd(C, 128)                     # smallest fold making k*C % 128 == 0
    if T % k == 0:
        # Lane-dense: fold k middle rows into the channel axis (free reshape);
        # the mask is constant across T, so tiling it k times is exact.
        x3 = x.reshape(B, T // k, k * C)
        mask3 = mask if k == 1 else jnp.tile(mask, (1, 1, k))
        out = _run_3d(x3, mask3, min_steps=min_steps)
    elif T > k:
        # Awkward shape: flatten middle+channel dims and tile lanes in
        # multiples of k*C -> still lane-dense, no bulk/remainder split.
        out = _run_flat(x.reshape(B, 1, T * C), mask.reshape(B, C), k * C,
                        min_steps=min_steps)
    else:
        # T < k: tiny middle extent; masked lane stores are acceptable here.
        out = _run_3d(x.reshape(B, T, C), mask, min_steps=min_steps)

    return out.reshape(orig_shape)


def _reference(x, drop, key):
    """Pure-jnp reference with the identical mask construction."""
    B, C = x.shape[0], x.shape[-1]
    keep_prob = 1.0 - float(drop)
    keep = jax.random.bernoulli(key, p=keep_prob, shape=(B, 1, C))
    mask = keep.astype(jnp.float32) * jnp.float32(1.0 / keep_prob)
    bshape = (B,) + (1,) * (x.ndim - 2) + (C,)
    return (x.astype(jnp.float32) * mask.reshape(bshape)).astype(x.dtype)


if __name__ == "__main__":
    root = jax.random.PRNGKey(0)
    k0, k1, k2, k3 = jax.random.split(root, 4)

    # (seq, hidden) style input: fold path (C=32, k=4, T=8 divisible).
    x = jax.random.normal(k0, (2, 8, 32), dtype=jnp.float32)
    y = jax.block_until_ready(spatial_dropout(x, drop=0.5, seed=1234, training=True))
    assert y.shape == x.shape and y.dtype == x.dtype
    ref = _reference(x, 0.5, jax.random.PRNGKey(1234))
    assert jnp.allclose(y, ref, atol=1e-6, rtol=1e-6), "f32 mismatch vs reference"

    # 4-D bf16 input (B, D1, D2, C): mask broadcasts over all middle dims.
    x4 = jax.random.normal(k1, (2, 4, 16, 16), dtype=jnp.bfloat16)
    y4 = jax.block_until_ready(spatial_dropout(x4, drop=0.3, seed=7, training=True))
    assert y4.shape == x4.shape and y4.dtype == x4.dtype
    ref4 = _reference(x4, 0.3, jax.random.PRNGKey(7))
    assert jnp.allclose(y4.astype(jnp.float32), ref4.astype(jnp.float32),
                        atol=1e-2, rtol=1e-2), "bf16 mismatch vs reference"

    # Awkward shape: C=48 (k=8), T=20 not divisible -> flattened lane-dense path.
    xc = jax.random.normal(k2, (2, 20, 48), dtype=jnp.float32)
    yc = jax.block_until_ready(spatial_dropout(xc, drop=0.4, seed=11, training=True))
    refc = _reference(xc, 0.4, jax.random.PRNGKey(11))
    assert jnp.allclose(yc, refc, atol=1e-6, rtol=1e-6), "awkward-C mismatch vs reference"

    # Larger lane-aligned input: exercises the >=2-grid-step (megacore) logic.
    xl = jax.random.normal(k3, (4, 512, 256), dtype=jnp.float32)
    yl = jax.block_until_ready(spatial_dropout(xl, drop=0.25, seed=3, training=True))
    refl = _reference(xl, 0.25, jax.random.PRNGKey(3))
    assert jnp.allclose(yl, refl, atol=1e-6, rtol=1e-6), "large-input mismatch vs reference"

    # Eval mode is identity; drop == 1 zeroes everything.
    assert bool(jnp.all(spatial_dropout(x, drop=0.5, training=False) == x))
    assert bool(jnp.all(spatial_dropout(x, drop=1.0, seed=5, training=True) == 0))

    print("KERNEL_OK")
</pallas_src>

<mosaic_0001>
module attributes {stable_mosaic.version = 11 : i64} {
  func.func @_scale_kernel(%arg0: i32, %arg1: i32, %arg2: i32, %arg3: memref<2x1x128xf32, #tpu.memory_space<vmem>>, %arg4: memref<2x2x128xf32, #tpu.memory_space<vmem>>, %arg5: memref<2x2x128xf32, #tpu.memory_space<vmem>>) attributes {dimension_semantics = [#tpu.dimension_semantics<parallel>, #tpu.dimension_semantics<parallel>, #tpu.dimension_semantics<parallel>], iteration_bounds = array<i64: 1, 1, 1>, scalar_prefetch = 0 : i64, scratch_operands = 0 : i64, tpu.core_type = #tpu.core_type<tc>, window_params = [{transform_indices = @transform_0, window_bounds = array<i64: 2, 1, 128>}, {transform_indices = @transform_1, window_bounds = array<i64: 2, 2, 128>}, {transform_indices = @transform_2, window_bounds = array<i64: 2, 2, 128>}]} {
    %c0 = arith.constant 0 : index
    %c0_0 = arith.constant 0 : index
    %c0_1 = arith.constant 0 : index
    %0 = vector.load %arg4[%c0, %c0_0, %c0_1] : memref<2x2x128xf32, #tpu.memory_space<vmem>>, vector<2x2x128xf32>
    %c0_2 = arith.constant 0 : index
    %c0_3 = arith.constant 0 : index
    %c0_4 = arith.constant 0 : index
    %1 = vector.load %arg3[%c0_2, %c0_3, %c0_4] : memref<2x1x128xf32, #tpu.memory_space<vmem>>, vector<2x1x128xf32>
    %2 = vector.broadcast %1 : vector<2x1x128xf32> to vector<2x2x128xf32>
    %3 = arith.mulf %0, %2 : vector<2x2x128xf32>
    %c0_5 = arith.constant 0 : index
    %c0_6 = arith.constant 0 : index
    %c0_7 = arith.constant 0 : index
    %4 = vector.load %arg5[%c0_5, %c0_6, %c0_7] : memref<2x2x128xf32, #tpu.memory_space<vmem>>, vector<2x2x128xf32>
    tpu.vector_store %arg5[%c0_5, %c0_6, %c0_7], %3 {strides = array<i32>} : memref<2x2x128xf32, #tpu.memory_space<vmem>>, vector<2x2x128xf32>,
    return
  }
  func.func @transform_0(%arg0: i32, %arg1: i32, %arg2: i32) -> (i32, i32, i32) {
    %c0_i32 = arith.constant 0 : i32
    %c0_i32_0 = arith.constant 0 : i32
    return %arg0, %c0_i32, %arg2 : i32, i32, i32
  }
  func.func @transform_1(%arg0: i32, %arg1: i32, %arg2: i32) -> (i32, i32, i32) {
    %c0_i32 = arith.constant 0 : i32
    return %arg0, %arg1, %arg2 : i32, i32, i32
  }
  func.func @transform_2(%arg0: i32, %arg1: i32, %arg2: i32) -> (i32, i32, i32) {
    %c0_i32 = arith.constant 0 : i32
    return %arg0, %arg1, %arg2 : i32, i32, i32
  }
}

</mosaic_0001>

<llo_original>
// kernel: tpu_custom_call.1
$region0: #{tpu_custom_call.1}
  #allocation0 [shape = 'u32[]', space=smem, size = 0x4, offset = 0x4, fixed_abs, tag = 'smem constant byte address 0x4 - core index']
  #allocation1 [shape = 'u32[72,128]{1,0:T(1,128)}', space=vmem, size = 0x9000, scoped, tag = 'internal scratch']
  %s0 = inlined_call_operand.vmem [shape: f32[2,1,128], index: 0, kind: input, shape index: {}]
  %s1 = inlined_call_operand.hbm [shape: f32[2,2,128], index: 1, kind: input, shape index: {}, may-alias: {1,2}]
  %s2 = inlined_call_operand.hbm [shape: f32[2,2,128], index: 2, kind: output, shape index: {}, may-alias: {1,2}]
  %s3 = sld [smem:[#allocation0]]
  $region22: #{tpu_custom_call.1} parent=0
    _
  %s5 = ssub.s32 1, %s3
  %s6 = scalar_select 0, %s5, %s3
  $region1: #{tpu_custom_call.1} parent=0
    #allocation2 [shape = 'u8[2048]{0}', space=vmem, size = 0x800, scoped, tag = 'input window, operand 1, single buffered']
    #allocation3 [shape = 's32[1]{0}', space=sflag, size = 0x4, scoped, tag = 'scoped memory for tpu_custom_call.1']
    #allocation4 [shape = 's32[1]{0}', space=sflag, size = 0x4, scoped, tag = 'scoped memory for tpu_custom_call.1']
    #allocation5 [shape = 'u8[2048]{0}', space=vmem, size = 0x800, scoped, tag = 'output window, operand 0, single buffered']
    %7 = vsyncpa [#allocation3], 0
    %8 = vsyncpa [#allocation4], 0
    // Predicated region
    $region2: #{tpu_custom_call.1} parent=1 // pred_check
      _
    $region3: #{tpu_custom_call.1} parent=1 // pred_check_branch
      %10 = sbr.rel (0) target = $region5
    $region4: #{tpu_custom_call.1} parent=1 // pred_region
      _
    $region5: #{tpu_custom_call.1} parent=1 // pred_fallthru
      _
    // Predicated region
    $region6: #{tpu_custom_call.1} parent=1 // pred_check
      _
    $region7: #{tpu_custom_call.1} parent=1 // pred_check_branch
      %12 = sbr.rel (0) target = $region9
    $region8: #{tpu_custom_call.1} parent=1 // pred_region
      %14 = vsyncadd [#allocation3], 0
      %s15 = sshll.u32 %s1, 4
      %s16 = int_to_ptr.hbm [resolvable:$true] %s15
      %s17 = sshll.u32 [#allocation2], 4
      %s18 = int_to_ptr.vmem [resolvable:$true] %s17
      %23 = dma.hbm_to_vmem [thread:$0]  %s16, 64, %s18, [#allocation3], 32, 32, 2
    $region9: #{tpu_custom_call.1} parent=1 // pred_fallthru
      _
    // Predicated region
    $region10: #{tpu_custom_call.1} parent=1 // pred_check
      _
    $region11: #{tpu_custom_call.1} parent=1 // pred_check_branch
      %25 = sbr.rel (0) target = $region13
    $region12: #{tpu_custom_call.1} parent=1 // pred_region
      %27 = dma.done [#allocation3], 64
    $region13: #{tpu_custom_call.1} parent=1 // pred_fallthru
      _
    %v28 = vld [vmem:[#allocation2] sm:$0x3]
    %v29 = vld [vmem:[#allocation2 + $0x2] sm:$0x3]
    %v30 = vld [vmem:[%s0] sm:$0x1]
    %v31 = vld [vmem:[%s0 + $0x1] sm:$0x1]
    %v34 = vperm.slane %v30, 0
    %v35 = vperm.slane %v31, 0
    %v38 = vmul.f32 %v28, %v34
    %v39 = vmul.f32 %v29, %v35
    %40 = vst [vmem:[#allocation5] sm:$0x3] %v38
    %41 = vst [vmem:[#allocation5 + $0x2] sm:$0x3] %v39
    // Predicated region
    $region14: #{tpu_custom_call.1} parent=1 // pred_check
      _
    $region15: #{tpu_custom_call.1} parent=1 // pred_check_branch
      %43 = sbr.rel (0) target = $region17
    $region16: #{tpu_custom_call.1} parent=1 // pred_region
      %45 = vsyncadd [#allocation4], 0
      %s46 = sshll.u32 [#allocation5], 4
      %s47 = int_to_ptr.vmem [resolvable:$true] %s46
      %s48 = sshll.u32 %s2, 4
      %s49 = int_to_ptr.hbm [resolvable:$true] %s48
      %54 = dma.vmem_to_hbm [thread:$0]  %s47, 64, %s49, [#allocation4], 32, 32, 2
    $region17: #{tpu_custom_call.1} parent=1 // pred_fallthru
      _
    // Predicated region
    $region18: #{tpu_custom_call.1} parent=1 // pred_check
      _
    $region19: #{tpu_custom_call.1} parent=1 // pred_check_branch
      %56 = sbr.rel (0) target = $region21
    $region20: #{tpu_custom_call.1} parent=1 // pred_region
      %58 = dma.done [#allocation4], 64
    $region21: #{tpu_custom_call.1} parent=1 // pred_fallthru
      _
    %59 = vsyncpa [#allocation3], 1
    %60 = vsyncpa [#allocation4], 1

</llo_original>
